<compile_context>
chip_gen: v5e
topology: v5e:2x2
jax: 0.10.0
libtpu: 0.0.40
codegen_flags: <defaults>
</compile_context>

<pallas_src>
import jax
import jax.numpy as jnp
from jax.experimental import pallas as pl
from jax.experimental.pallas import tpu as pltpu


def critic_kernel(sa_ref, w1_ref, b1_ref, w2_ref, b2_ref, w3_ref, b3_ref, out_ref):
    # In-kernel f32 -> bf16 cast (VPU, free slot): avoids a separate XLA
    # convert pass over the whole input in the wrapper.
    x = sa_ref[...].astype(w1_ref.dtype)
    # layer1: Linear + ReLU (bf16 MXU matmul, f32 accumulation, f32 VPU max)
    h = jnp.dot(x, w1_ref[...], preferred_element_type=jnp.float32) + b1_ref[...]
    h = jnp.maximum(h, 0.0)
    # layer2: Linear + ReLU
    h = jnp.dot(h.astype(w2_ref.dtype), w2_ref[...],
                preferred_element_type=jnp.float32) + b2_ref[...]
    h = jnp.maximum(h, 0.0)
    # layer3: single output column -> f32 VPU multiply + lane reduce instead of
    # a 1-wide MXU matmul; SMEM scalar bias; lane-dense (1, 1, TB) store.
    q = jnp.sum(h * w3_ref[...], axis=-1) + b3_ref[0, 0]     # (TB,) f32
    out_ref[...] = q[None, None, :]


def _round_up(x, m):
    return ((x + m - 1) // m) * m


def critic_forward(sa, w1, b1, w2, b2, w3, b3, *, block_b=1024,
                   compute_dtype=jnp.bfloat16):
    """MADDPG Critic forward pass.

    sa: (B, n_agents, per_agent_dim) float32
    w1: (in_dim, n_hidden_1)      b1: (1, n_hidden_1)
    w2: (n_hidden_1, n_hidden_2)  b2: (1, n_hidden_2)
    w3: (1, n_hidden_2)           b3: (1, 1)
    Returns (B, 1) float32.
    """
    B = sa.shape[0]
    sa_flat = sa.reshape(B, sa.shape[1] * sa.shape[2])   # metadata-only reshape
    in_dim = sa_flat.shape[1]
    h1_dim = w1.shape[1]
    h2_dim = w2.shape[1]

    # Batch tile: multiple of 8 (sublane constraint), capped by block_b.
    # Prefer >= 2 tiles when the batch allows it so both v7x TensorCores get
    # work under the "parallel" batch axis.
    tb = _round_up(min(block_b, B), 8)
    num_tiles = pl.cdiv(B, tb)
    if num_tiles == 1 and B > 8:
        tb = _round_up(pl.cdiv(B, 2), 8)
        num_tiles = pl.cdiv(B, tb)

    # Only the tiny weights are cast ahead of time; the input stays f32 in HBM
    # and is cast inside the kernel. The ragged tail tile is handled by Pallas
    # edge-block padding (garbage rows are sliced off below).
    w1c = w1.astype(compute_dtype)
    w2c = w2.astype(compute_dtype)

    out = pl.pallas_call(
        critic_kernel,
        out_shape=jax.ShapeDtypeStruct((num_tiles, 1, tb), jnp.float32),
        grid=(num_tiles,),
        in_specs=[
            pl.BlockSpec((tb, in_dim), lambda i: (i, 0)),       # streamed f32 tile
            pl.BlockSpec((in_dim, h1_dim), lambda i: (0, 0)),   # resident weights
            pl.BlockSpec((1, h1_dim), lambda i: (0, 0)),
            pl.BlockSpec((h1_dim, h2_dim), lambda i: (0, 0)),
            pl.BlockSpec((1, h2_dim), lambda i: (0, 0)),
            pl.BlockSpec((1, h2_dim), lambda i: (0, 0)),        # W3 as a row vector
            pl.BlockSpec(memory_space=pltpu.MemorySpace.SMEM),  # scalar bias b3
        ],
        out_specs=pl.BlockSpec((1, 1, tb), lambda i: (i, 0, 0)),  # lane-dense output
        compiler_params=pltpu.CompilerParams(
            dimension_semantics=("parallel",),   # megacore sharding on v7x
        ),
    )(sa_flat, w1c, b1, w2c, b2, w3, b3)

    return out.reshape(num_tiles * tb, 1)[:B]


def critic_reference(sa, w1, b1, w2, b2, w3, b3, compute_dtype=jnp.float32):
    """Plain-JAX reference with the same dtype pipeline as the kernel."""
    B = sa.shape[0]
    x = sa.reshape(B, -1).astype(compute_dtype)
    h = jnp.maximum(jnp.dot(x, w1.astype(compute_dtype),
                            preferred_element_type=jnp.float32) + b1, 0.0)
    h = jnp.maximum(jnp.dot(h.astype(compute_dtype), w2.astype(compute_dtype),
                            preferred_element_type=jnp.float32) + b2, 0.0)
    return jnp.sum(h * w3, axis=-1, keepdims=True) + b3


def init_linear_params(key, fan_in, fan_out):
    """PyTorch nn.Linear default init (uniform +-1/sqrt(fan_in)); W stored
    transposed as (fan_in, fan_out), b as (1, fan_out)."""
    kw, kb = jax.random.split(key)
    bound = 1.0 / jnp.sqrt(float(fan_in))
    w = jax.random.uniform(kw, (fan_in, fan_out), jnp.float32, -bound, bound)
    b = jax.random.uniform(kb, (1, fan_out), jnp.float32, -bound, bound)
    return w, b


if __name__ == "__main__":
    # Module-consistent small shapes:
    #   B=2 agents' (state, action) concat: n_agents=4, per-agent dim=8 -> in_dim=32
    #   n_hidden_1 = n_hidden_2 = 32, scalar Q output.
    B, N_AGENTS, PER_AGENT = 2, 4, 8
    in_dim = N_AGENTS * PER_AGENT
    n_hidden_1, n_hidden_2 = 32, 32

    key = jax.random.PRNGKey(0)
    k_sa, k1, k2, k3 = jax.random.split(key, 4)

    sa = jax.random.normal(k_sa, (B, N_AGENTS, PER_AGENT), jnp.float32)
    w1, b1 = init_linear_params(k1, in_dim, n_hidden_1)
    w2, b2 = init_linear_params(k2, n_hidden_1, n_hidden_2)
    w3_col, b3 = init_linear_params(k3, n_hidden_2, 1)
    w3 = w3_col.T                       # (1, n_hidden_2) row for the VPU reduce

    out = jax.block_until_ready(critic_forward(sa, w1, b1, w2, b2, w3, b3))
    assert out.shape == (B, 1)

    # Same-dtype-pipeline reference (tight) and pure-f32 reference (loose, bf16 MXU).
    ref_bf16 = critic_reference(sa, w1, b1, w2, b2, w3, b3, jnp.bfloat16)
    ref_f32 = critic_reference(sa, w1, b1, w2, b2, w3, b3, jnp.float32)
    assert jnp.allclose(out, ref_bf16, atol=2e-3, rtol=2e-3)
    assert jnp.allclose(out, ref_f32, atol=1e-1, rtol=1e-1)

    # Larger ragged batch: exercises the multi-tile grid + Pallas edge-block
    # handling (no wrapper-side padding) with both default and small tiles.
    B2 = 300
    sa2 = jax.random.normal(jax.random.PRNGKey(1), (B2, N_AGENTS, PER_AGENT),
                            jnp.float32)
    ref2 = critic_reference(sa2, w1, b1, w2, b2, w3, b3, jnp.bfloat16)

    out2 = jax.block_until_ready(critic_forward(sa2, w1, b1, w2, b2, w3, b3))
    assert out2.shape == (B2, 1)
    assert jnp.allclose(out2, ref2, atol=2e-3, rtol=2e-3)

    out3 = jax.block_until_ready(
        critic_forward(sa2, w1, b1, w2, b2, w3, b3, block_b=128))
    assert out3.shape == (B2, 1)
    assert jnp.allclose(out3, ref2, atol=2e-3, rtol=2e-3)

    print("KERNEL_OK")
</pallas_src>

<mosaic_0001>
module attributes {stable_mosaic.version = 11 : i64} {
  func.func @critic_kernel(%arg0: i32, %arg1: memref<8x32xf32, #tpu.memory_space<vmem>>, %arg2: memref<32x32xbf16, #tpu.memory_space<vmem>>, %arg3: memref<1x32xf32, #tpu.memory_space<vmem>>, %arg4: memref<32x32xbf16, #tpu.memory_space<vmem>>, %arg5: memref<1x32xf32, #tpu.memory_space<vmem>>, %arg6: memref<1x32xf32, #tpu.memory_space<vmem>>, %arg7: memref<1x1xf32, #tpu.memory_space<smem>>, %arg8: memref<1x1x8xf32, #tpu.memory_space<vmem>>) attributes {dimension_semantics = [#tpu.dimension_semantics<parallel>], iteration_bounds = array<i64: 1>, scalar_prefetch = 0 : i64, scratch_operands = 0 : i64, tpu.core_type = #tpu.core_type<tc>, window_params = [{transform_indices = @transform_0, window_bounds = array<i64: 8, 32>}, {pipeline_mode = #tpu.pipeline_mode<synchronous>, transform_indices = @transform_1, window_bounds = array<i64: 32, 32>}, {pipeline_mode = #tpu.pipeline_mode<synchronous>, transform_indices = @transform_2, window_bounds = array<i64: 1, 32>}, {pipeline_mode = #tpu.pipeline_mode<synchronous>, transform_indices = @transform_3, window_bounds = array<i64: 32, 32>}, {pipeline_mode = #tpu.pipeline_mode<synchronous>, transform_indices = @transform_4, window_bounds = array<i64: 1, 32>}, {pipeline_mode = #tpu.pipeline_mode<synchronous>, transform_indices = @transform_5, window_bounds = array<i64: 1, 32>}, {transform_indices = @transform_6, window_bounds = array<i64: 1, 1>}, {transform_indices = @transform_7, window_bounds = array<i64: 1, 1, 8>}]} {
    %c0 = arith.constant 0 : index
    %c0_0 = arith.constant 0 : index
    %0 = vector.load %arg1[%c0, %c0_0] : memref<8x32xf32, #tpu.memory_space<vmem>>, vector<8x32xf32>
    %1 = arith.truncf %0 : vector<8x32xf32> to vector<8x32xbf16>
    %c0_1 = arith.constant 0 : index
    %c0_2 = arith.constant 0 : index
    %2 = vector.load %arg2[%c0_1, %c0_2] : memref<32x32xbf16, #tpu.memory_space<vmem>>, vector<32x32xbf16>
    %cst = arith.constant dense<0.000000e+00> : vector<8x32xf32>
    %3 = tpu.matmul %1, %2, %cst {dimension_numbers = #tpu.dot_dimension_numbers<[1], [0], [0], [1], [0, 0, 1, 1], [], []>} : vector<8x32xbf16>, vector<32x32xbf16>, vector<8x32xf32> -> vector<8x32xf32>
    %c0_3 = arith.constant 0 : index
    %c0_4 = arith.constant 0 : index
    %4 = vector.load %arg3[%c0_3, %c0_4] : memref<1x32xf32, #tpu.memory_space<vmem>>, vector<1x32xf32>
    %5 = vector.broadcast %4 : vector<1x32xf32> to vector<8x32xf32>
    %6 = arith.addf %3, %5 : vector<8x32xf32>
    %cst_5 = arith.constant 0.000000e+00 : f32
    %7 = vector.broadcast %cst_5 : f32 to vector<8x32xf32>
    %8 = arith.maximumf %6, %7 : vector<8x32xf32>
    %9 = arith.truncf %8 : vector<8x32xf32> to vector<8x32xbf16>
    %c0_6 = arith.constant 0 : index
    %c0_7 = arith.constant 0 : index
    %10 = vector.load %arg4[%c0_6, %c0_7] : memref<32x32xbf16, #tpu.memory_space<vmem>>, vector<32x32xbf16>
    %cst_8 = arith.constant dense<0.000000e+00> : vector<8x32xf32>
    %11 = tpu.matmul %9, %10, %cst_8 {dimension_numbers = #tpu.dot_dimension_numbers<[1], [0], [0], [1], [0, 0, 1, 1], [], []>} : vector<8x32xbf16>, vector<32x32xbf16>, vector<8x32xf32> -> vector<8x32xf32>
    %c0_9 = arith.constant 0 : index
    %c0_10 = arith.constant 0 : index
    %12 = vector.load %arg5[%c0_9, %c0_10] : memref<1x32xf32, #tpu.memory_space<vmem>>, vector<1x32xf32>
    %13 = vector.broadcast %12 : vector<1x32xf32> to vector<8x32xf32>
    %14 = arith.addf %11, %13 : vector<8x32xf32>
    %cst_11 = arith.constant 0.000000e+00 : f32
    %15 = vector.broadcast %cst_11 : f32 to vector<8x32xf32>
    %16 = arith.maximumf %14, %15 : vector<8x32xf32>
    %c0_12 = arith.constant 0 : index
    %c0_13 = arith.constant 0 : index
    %17 = vector.load %arg6[%c0_12, %c0_13] : memref<1x32xf32, #tpu.memory_space<vmem>>, vector<1x32xf32>
    %18 = vector.broadcast %17 : vector<1x32xf32> to vector<8x32xf32>
    %19 = arith.mulf %16, %18 : vector<8x32xf32>
    %cst_14 = arith.constant dense<0.000000e+00> : vector<8xf32>
    %20 = vector.multi_reduction <add>, %19, %cst_14 [1] : vector<8x32xf32> to vector<8xf32>
    %c0_15 = arith.constant 0 : index
    %c0_16 = arith.constant 0 : index
    %21 = memref.load %arg7[%c0_15, %c0_16] : memref<1x1xf32, #tpu.memory_space<smem>>
    %22 = vector.broadcast %21 : f32 to vector<8xf32>
    %23 = arith.addf %20, %22 : vector<8xf32>
    %24 = vector.shape_cast %23 : vector<8xf32> to vector<1x1x8xf32>
    %c0_17 = arith.constant 0 : index
    %c0_18 = arith.constant 0 : index
    %c0_19 = arith.constant 0 : index
    %25 = vector.load %arg8[%c0_17, %c0_18, %c0_19] : memref<1x1x8xf32, #tpu.memory_space<vmem>>, vector<1x1x8xf32>
    tpu.vector_store %arg8[%c0_17, %c0_18, %c0_19], %24 {strides = array<i32>} : memref<1x1x8xf32, #tpu.memory_space<vmem>>, vector<1x1x8xf32>,
    return
  }
  func.func @transform_0(%arg0: i32) -> (i32, i32) {
    %c0_i32 = arith.constant 0 : i32
    %c0_i32_0 = arith.constant 0 : i32
    return %arg0, %c0_i32 : i32, i32
  }
  func.func @transform_1(%arg0: i32) -> (i32, i32) {
    %c0_i32 = arith.constant 0 : i32
    %c0_i32_0 = arith.constant 0 : i32
    %c0_i32_1 = arith.constant 0 : i32
    return %c0_i32, %c0_i32_0 : i32, i32
  }
  func.func @transform_2(%arg0: i32) -> (i32, i32) {
    %c0_i32 = arith.constant 0 : i32
    %c0_i32_0 = arith.constant 0 : i32
    %c0_i32_1 = arith.constant 0 : i32
    return %c0_i32, %c0_i32_0 : i32, i32
  }
  func.func @transform_3(%arg0: i32) -> (i32, i32) {
    %c0_i32 = arith.constant 0 : i32
    %c0_i32_0 = arith.constant 0 : i32
    %c0_i32_1 = arith.constant 0 : i32
    return %c0_i32, %c0_i32_0 : i32, i32
  }
  func.func @transform_4(%arg0: i32) -> (i32, i32) {
    %c0_i32 = arith.constant 0 : i32
    %c0_i32_0 = arith.constant 0 : i32
    %c0_i32_1 = arith.constant 0 : i32
    return %c0_i32, %c0_i32_0 : i32, i32
  }
  func.func @transform_5(%arg0: i32) -> (i32, i32) {
    %c0_i32 = arith.constant 0 : i32
    %c0_i32_0 = arith.constant 0 : i32
    %c0_i32_1 = arith.constant 0 : i32
    return %c0_i32, %c0_i32_0 : i32, i32
  }
  func.func @transform_6(%arg0: i32) -> (i32, i32) {
    %c0_i32 = arith.constant 0 : i32
    %c0_i32_0 = arith.constant 0 : i32
    %c0_i32_1 = arith.constant 0 : i32
    return %c0_i32, %c0_i32_0 : i32, i32
  }
  func.func @transform_7(%arg0: i32) -> (i32, i32, i32) {
    %c0_i32 = arith.constant 0 : i32
    %c0_i32_0 = arith.constant 0 : i32
    %c0_i32_1 = arith.constant 0 : i32
    return %arg0, %c0_i32, %c0_i32_0 : i32, i32, i32
  }
}

</mosaic_0001>

<llo_original>
// kernel: tpu_custom_call.1
$region0: #{tpu_custom_call.1}
  #allocation0 [shape = 'u32[]', space=smem, size = 0x4, offset = 0x4, fixed_abs, tag = 'smem constant byte address 0x4 - core index']
  #allocation1 [shape = 'u32[72,128]{1,0:T(1,128)}', space=vmem, size = 0x9000, scoped, tag = 'internal scratch']
  #allocation2 [shape = 'f32[1,1]{1,0:T(1,128)S(6)}', space=smem, size = 0x200, scoped, tag = 'scoped memory for tpu_custom_call.1']
  %s0 = inlined_call_operand.vmem [shape: f32[2,32], index: 0, kind: input, shape index: {}]
  %s1 = inlined_call_operand.hbm [shape: bf16[32,32], index: 1, kind: input, shape index: {}]
  %s2 = inlined_call_operand.vmem [shape: f32[1,32], index: 2, kind: input, shape index: {}]
  %s3 = inlined_call_operand.hbm [shape: bf16[32,32], index: 3, kind: input, shape index: {}]
  %s4 = inlined_call_operand.vmem [shape: f32[1,32], index: 4, kind: input, shape index: {}]
  %s5 = inlined_call_operand.vmem [shape: f32[1,32], index: 5, kind: input, shape index: {}]
  %s6 = inlined_call_operand.<no memory space> [shape: f32[1,1], index: 6, kind: input, shape index: {}]
  %s7 = inlined_call_operand.hbm [shape: f32[1,1,8], index: 7, kind: output, shape index: {}]
  %s8 = sld [smem:[#allocation0]]
  $region46: #{tpu_custom_call.1} parent=0
    _
  %s10 = ssub.s32 1, %s8
  %s11 = scalar_select 0, %s10, %s8
  %12 = sst [smem:[#allocation2]] %s6
  $region1: #{tpu_custom_call.1} parent=0
    #allocation3 [shape = 'u8[8192]{0}', space=vmem, size = 0x2000, scoped, tag = 'input window, operand 1, single buffered']
    #allocation4 [shape = 's32[1]{0}', space=sflag, size = 0x4, scoped, tag = 'scoped memory for tpu_custom_call.1']
    #allocation5 [shape = 's32[1]{0}', space=sflag, size = 0x4, scoped, tag = 'scoped memory for tpu_custom_call.1']
    #allocation6 [shape = 'u8[8192]{0}', space=vmem, size = 0x2000, scoped, tag = 'input window, operand 3, single buffered']
    #allocation7 [shape = 's32[1]{0}', space=sflag, size = 0x4, scoped, tag = 'scoped memory for tpu_custom_call.1']
    #allocation8 [shape = 'u8[512]{0}', space=vmem, size = 0x400, scoped, tag = 'output window, operand 0, single buffered']
    %13 = vsyncpa [#allocation4], 0
    %14 = vsyncpa [#allocation7], 0
    %15 = vsyncpa [#allocation5], 0
    // Predicated region
    $region2: #{tpu_custom_call.1} parent=1 // pred_check
      _
    $region3: #{tpu_custom_call.1} parent=1 // pred_check_branch
      %17 = sbr.rel (0) target = $region5
    $region4: #{tpu_custom_call.1} parent=1 // pred_region
      _
    $region5: #{tpu_custom_call.1} parent=1 // pred_fallthru
      _
    // Predicated region
    $region6: #{tpu_custom_call.1} parent=1 // pred_check
      _
    $region7: #{tpu_custom_call.1} parent=1 // pred_check_branch
      %19 = sbr.rel (0) target = $region9
    $region8: #{tpu_custom_call.1} parent=1 // pred_region
      %21 = vsyncadd [#allocation4], 0
      %s22 = sshll.u32 %s1, 4
      %s23 = int_to_ptr.hbm [resolvable:$true] %s22
      %s24 = sshll.u32 [#allocation3], 4
      %s25 = int_to_ptr.vmem [resolvable:$true] %s24
      %30 = dma.hbm_to_vmem [thread:$0]  %s23, 256, %s25, [#allocation4], 64, 64, 4
    $region9: #{tpu_custom_call.1} parent=1 // pred_fallthru
      _
    // Predicated region
    $region10: #{tpu_custom_call.1} parent=1 // pred_check
      _
    $region11: #{tpu_custom_call.1} parent=1 // pred_check_branch
      %32 = sbr.rel (0) target = $region13
    $region12: #{tpu_custom_call.1} parent=1 // pred_region
      _
    $region13: #{tpu_custom_call.1} parent=1 // pred_fallthru
      _
    // Predicated region
    $region14: #{tpu_custom_call.1} parent=1 // pred_check
      _
    $region15: #{tpu_custom_call.1} parent=1 // pred_check_branch
      %34 = sbr.rel (0) target = $region17
    $region16: #{tpu_custom_call.1} parent=1 // pred_region
      %36 = vsyncadd [#allocation7], 0
      %s37 = sshll.u32 %s3, 4
      %s38 = int_to_ptr.hbm [resolvable:$true] %s37
      %s39 = sshll.u32 [#allocation6], 4
      %s40 = int_to_ptr.vmem [resolvable:$true] %s39
      %45 = dma.hbm_to_vmem [thread:$0]  %s38, 256, %s40, [#allocation7], 64, 64, 4
    $region17: #{tpu_custom_call.1} parent=1 // pred_fallthru
      _
    // Predicated region
    $region18: #{tpu_custom_call.1} parent=1 // pred_check
      _
    $region19: #{tpu_custom_call.1} parent=1 // pred_check_branch
      %47 = sbr.rel (0) target = $region21
    $region20: #{tpu_custom_call.1} parent=1 // pred_region
      _
    $region21: #{tpu_custom_call.1} parent=1 // pred_fallthru
      _
    // Predicated region
    $region22: #{tpu_custom_call.1} parent=1 // pred_check
      _
    $region23: #{tpu_custom_call.1} parent=1 // pred_check_branch
      %49 = sbr.rel (0) target = $region25
    $region24: #{tpu_custom_call.1} parent=1 // pred_region
      _
    $region25: #{tpu_custom_call.1} parent=1 // pred_fallthru
      _
    // Predicated region
    $region26: #{tpu_custom_call.1} parent=1 // pred_check
      _
    $region27: #{tpu_custom_call.1} parent=1 // pred_check_branch
      %51 = sbr.rel (0) target = $region29
    $region28: #{tpu_custom_call.1} parent=1 // pred_region
      _
    $region29: #{tpu_custom_call.1} parent=1 // pred_fallthru
      _
    // Predicated region
    $region30: #{tpu_custom_call.1} parent=1 // pred_check
      _
    $region31: #{tpu_custom_call.1} parent=1 // pred_check_branch
      %53 = sbr.rel (0) target = $region33
    $region32: #{tpu_custom_call.1} parent=1 // pred_region
      %55 = dma.done [#allocation4], 256
    $region33: #{tpu_custom_call.1} parent=1 // pred_fallthru
      _
    // Predicated region
    $region34: #{tpu_custom_call.1} parent=1 // pred_check
      _
    $region35: #{tpu_custom_call.1} parent=1 // pred_check_branch
      %57 = sbr.rel (0) target = $region37
    $region36: #{tpu_custom_call.1} parent=1 // pred_region
      %59 = dma.done [#allocation7], 256
    $region37: #{tpu_custom_call.1} parent=1 // pred_fallthru
      _
    %v61 = vld [vmem:[%s0] sm:$0xff]
    %v62 = vpack.c.bf16 %v61, %v61
    %v63 = vld [vmem:[#allocation3] sm:$0xf]
    %v64 = vld [vmem:[#allocation3 + $0x4] sm:$0xf]
    %v65 = vld [vmem:[#allocation3 + $0x8] sm:$0xf]
    %v66 = vld [vmem:[#allocation3 + $0xc] sm:$0xf]
    %v67 = vld [vmem:[%s2] sm:$0x1]
    %v69 = vperm.slane %v67, 0
    %v75 = vunpack.c.l.b16 %v63
    %v76 = vunpack.c.l.b16 %v64
    %v77 = vunpack.c.l.b16 %v65
    %v78 = vunpack.c.l.b16 %v66
    %v79 = vpack.c.b16 %v76, %v75
    %v80 = vpack.c.b16 %v78, %v77
    %vm83 = vcmask 261120
    %v85 = vsel %vm83, %v62, 0
    %87 = vmatpush.bf16.msra.mxu0 0
    %88 = vmatpush.bf16.msra.mxu0 0
    %89 = vmatpush.bf16.msra.mxu0 0
    %90 = vmatpush.bf16.msra.mxu0 0
    %91 = vmatpush.bf16.msra.mxu0 0
    %92 = vmatpush.bf16.msra.mxu0 0
    %93 = vmatpush.bf16.msra.mxu0 %v80
    %94 = vmatpush.bf16.msra.mxu0 %v79
    %95 = vmatmul.bf16.gmra.mxu0 %v85
    %v96 = vpop.f32.mrf.mxu0
    %v97 = vadd.f32 %v69, %v96
    %v98 = vpop.f32.mrf.mxu0
    %99 = vdwg.mxu0
    %v100 = vmax.f32 %v97, 0.0
    %v101 = vpack.c.bf16 %v100, %v100
    %v102 = vld [vmem:[#allocation6] sm:$0xf]
    %v103 = vld [vmem:[#allocation6 + $0x4] sm:$0xf]
    %v104 = vld [vmem:[#allocation6 + $0x8] sm:$0xf]
    %v105 = vld [vmem:[#allocation6 + $0xc] sm:$0xf]
    %v106 = vld [vmem:[%s4] sm:$0x1]
    %v108 = vperm.slane %v106, 0
    %v114 = vunpack.c.l.b16 %v102
    %v115 = vunpack.c.l.b16 %v103
    %v116 = vunpack.c.l.b16 %v104
    %v117 = vunpack.c.l.b16 %v105
    %v118 = vpack.c.b16 %v115, %v114
    %v119 = vpack.c.b16 %v117, %v116
    %v123 = vsel %vm83, %v101, 0
    %125 = vmatpush.bf16.msra.mxu0 0
    %126 = vmatpush.bf16.msra.mxu0 0
    %127 = vmatpush.bf16.msra.mxu0 0
    %128 = vmatpush.bf16.msra.mxu0 0
    %129 = vmatpush.bf16.msra.mxu0 0
    %130 = vmatpush.bf16.msra.mxu0 0
    %131 = vmatpush.bf16.msra.mxu0 %v119
    %132 = vmatpush.bf16.msra.mxu0 %v118
    %133 = vmatmul.bf16.gmra.mxu0 %v123
    %v134 = vpop.f32.mrf.mxu0
    %v135 = vadd.f32 %v108, %v134
    %v136 = vpop.f32.mrf.mxu0
    %137 = vdwg.mxu0
    %v138 = vmax.f32 %v135, 0.0
    %v139 = vld [vmem:[%s5] sm:$0x1]
    %v141 = vperm.slane %v139, 0
    %v143 = vmul.f32 %v138, %v141
    %v144 = vsel %vm83, %v143, 0.0
    %145 = vadd.xlane.f32.xlu0 %v144
    %v146 = vpop.xlane.xlu0 %145
    %s147 = sld [smem:[#allocation2]]
    %v148 = vstv %s147
    %v149 = vadd.f32 %v146, %v148
    %v151 = vlaneseq
    %v152 = vand.u32 %v151, 127
    %v153 = vperm.slane %v149, %v152
    %vm155 = vcmask 57344
    %156 = vst.msk [vmem:[#allocation8] sm:$0x1] %vm155, %v153
    // Predicated region
    $region38: #{tpu_custom_call.1} parent=1 // pred_check
      _
    $region39: #{tpu_custom_call.1} parent=1 // pred_check_branch
      %158 = sbr.rel (0) target = $region41
    $region40: #{tpu_custom_call.1} parent=1 // pred_region
      %160 = vsyncadd [#allocation5], 0
      %s162 = sshll.u32 [#allocation8], 4
      %s163 = int_to_ptr.vmem [resolvable:$true] %s162
      %s164 = sshll.u32 %s7, 4
      %s165 = int_to_ptr.hbm [resolvable:$true] %s164
      %167 = dma.vmem_to_hbm [thread:$0]  %s163, 16, %s165, [#allocation5]
    $region41: #{tpu_custom_call.1} parent=1 // pred_fallthru
      _
    // Predicated region
    $region42: #{tpu_custom_call.1} parent=1 // pred_check
      _
    $region43: #{tpu_custom_call.1} parent=1 // pred_check_branch
      %169 = sbr.rel (0) target = $region45
    $region44: #{tpu_custom_call.1} parent=1 // pred_region
      %171 = dma.done [#allocation5], 16
    $region45: #{tpu_custom_call.1} parent=1 // pred_fallthru
      _
    %172 = vsyncpa [#allocation4], 1
    %173 = vsyncpa [#allocation7], 1
    %174 = vsyncpa [#allocation5], 1

</llo_original>
